<compile_context>
chip_gen: v7x
topology: tpu7x:2x2x1
jax: 0.10.0
libtpu: 0.0.40
codegen_flags: <defaults>
</compile_context>

<pallas_src>
import math

import jax
import jax.numpy as jnp
from jax.experimental import pallas as pl
from jax.experimental.pallas import tpu as pltpu

_EPS = 1e-16
_PI = math.pi

LANES = 128
SUBLANES = 8

# Set True (v7x tuning) to lower the divide to the EUP approximate-reciprocal
# path, freeing VALU slots at the cost of ~approx-recip relative accuracy.
# Default False keeps an exact f32 division for strict parity with PyTorch.
_APPROX_RECIPROCAL = False


def _round_up(a: int, b: int) -> int:
    return ((a + b - 1) // b) * b


def _arctan_hf_kernel(x_ref, o_ref):
    # NOTE: the last grid block may be ragged (block rows > remaining rows).
    # The overhang region holds unspecified data and may produce Inf/NaN in
    # sin/cos/reciprocal below; this is safe because Pallas masks the
    # out-of-bounds writeback.
    x = x_ref[...]
    if x.dtype == jnp.bfloat16:
        # bf16 path (v6e/v7x have bf16 VPU lanes): clamp + affine in bf16
        # (exact for bf16-precision data), widen only for the transcendentals.
        x = jnp.clip(x, _EPS, 1.0 - _EPS)
        u = (x - 0.5).astype(jnp.float32)
    else:
        xf = jnp.clip(x.astype(jnp.float32), _EPS, 1.0 - _EPS)
        u = xf - 0.5  # exact for x in [0.25, 1]; avoids pi*x - pi/2 cancellation

    arg = _PI * u                      # == pi*x - pi/2
    s = jnp.sin(arg)
    c = jnp.cos(arg)
    y = s * pl.reciprocal(c, approx=_APPROX_RECIPROCAL)   # tan(pi*(x - 1/2))
    o_ref[...] = y.astype(o_ref.dtype)


def _tail_formula(x: jax.Array) -> jax.Array:
    """Same math as the kernel, for the < 128-element ragged tail."""
    xf = jnp.clip(x.astype(jnp.float32), _EPS, 1.0 - _EPS)
    u = xf - 0.5
    return (jnp.sin(_PI * u) / jnp.cos(_PI * u)).astype(x.dtype)


def _arctan_hf_impl(x: jax.Array, tile_rows: int = 8192) -> jax.Array:
    """Elementwise Arctan_Hf forward, computed in a Pallas TPU kernel."""
    orig_shape = x.shape
    orig_dtype = x.dtype

    flat = x.reshape(-1)
    n = flat.shape[0]
    n_main = (n // LANES) * LANES      # bulk handled by the kernel
    rem = n - n_main                   # < 128 leftover elements
    rows = n_main // LANES

    if rows == 0:
        # Entire array is smaller than one 128-lane row; a kernel launch is
        # not worth it — compute directly.
        return _tail_formula(flat).reshape(orig_shape)

    # Row tile: big enough to amortize the ~0.35 us per-grid-step overhead,
    # small enough that (a) double-buffered in+out stays inside VMEM on
    # v5e/v6e/v7x and (b) the grid has >= ~4 blocks so the "parallel" axis
    # can be sharded across both TensorCores on v7x.
    tr = min(int(tile_rows), _round_up(pl.cdiv(rows, 4), SUBLANES))
    tr = _round_up(max(tr, SUBLANES), SUBLANES)
    grid = (pl.cdiv(rows, tr),)

    x_main = flat if rem == 0 else flat[:n_main]
    x2d = x_main.reshape(rows, LANES)

    out2d = pl.pallas_call(
        _arctan_hf_kernel,
        out_shape=jax.ShapeDtypeStruct((rows, LANES), orig_dtype),
        grid_spec=pltpu.PrefetchScalarGridSpec(
            num_scalar_prefetch=0,
            grid=grid,
            in_specs=[pl.BlockSpec((tr, LANES), lambda i: (i, 0))],
            out_specs=pl.BlockSpec((tr, LANES), lambda i: (i, 0)),
        ),
        compiler_params=pltpu.CompilerParams(
            dimension_semantics=("parallel",),
            vmem_limit_bytes=32 * 1024 * 1024,
        ),
    )(x2d)

    out_main = out2d.reshape(n_main)
    if rem == 0:
        return out_main.reshape(orig_shape)

    # Ragged tail (< 128 elements): compute directly and stitch.  This costs
    # one output-sized concatenate instead of the previous full pad + slice
    # round trips (two extra HBM passes).
    out_tail = _tail_formula(flat[n_main:])
    return jnp.concatenate([out_main, out_tail]).reshape(orig_shape)


arctan_hf = jax.jit(_arctan_hf_impl, static_argnames=("tile_rows",))


def _reference(x):
    # Faithful float32 rendering of the PyTorch module.
    xf = jnp.clip(x.astype(jnp.float32), _EPS, 1.0 - _EPS)
    return jnp.tan(_PI * xf - _PI / 2.0).astype(x.dtype)


if __name__ == "__main__":
    key = jax.random.PRNGKey(0)
    k1, k2 = jax.random.split(key)

    # Main test: NCHW-like input with CDF-style values strictly inside (0, 1).
    # 2*4*16*16 = 2048 elements (multiple of 128 -> zero-copy fast path,
    # grid of 2 blocks).
    x1 = jax.random.uniform(k1, (2, 4, 16, 16), dtype=jnp.float32,
                            minval=0.02, maxval=0.98)
    y1 = jax.block_until_ready(arctan_hf(x1))
    y1_ref = _reference(x1)
    assert y1.shape == x1.shape and y1.dtype == x1.dtype
    assert bool(jnp.allclose(y1, y1_ref, rtol=1e-4, atol=1e-5)), "mismatch (main)"

    # Secondary test: n % 128 != 0 exercises the ragged-tail path
    # (9*127 = 1143 -> 8 full rows through the kernel + 119-element tail).
    x2 = jax.random.uniform(k2, (9, 127), dtype=jnp.float32,
                            minval=0.02, maxval=0.98)
    y2 = jax.block_until_ready(arctan_hf(x2))
    y2_ref = _reference(x2)
    assert y2.shape == x2.shape
    assert bool(jnp.allclose(y2, y2_ref, rtol=1e-4, atol=1e-5)), "mismatch (ragged)"

    # Clamp semantics: out-of-range inputs must behave exactly like inputs
    # pre-clamped to (eps, 1 - eps).  (We compare kernel-vs-kernel here since
    # the clamped endpoints sit on the tan pole, where comparing different
    # transcendental lowerings numerically is meaningless.)
    specials = jnp.array([-0.5, 0.0, 0.25, 0.5, 0.75, 1.0, 1.5, 2.0],
                         dtype=jnp.float32)
    x3 = jnp.tile(specials[:, None], (1, LANES))          # (8, 128)
    y3 = jax.block_until_ready(arctan_hf(x3))
    y3c = jax.block_until_ready(arctan_hf(jnp.clip(x3, _EPS, 1.0 - _EPS)))
    assert bool(jnp.all(y3 == y3c)), "clamp semantics mismatch"

    print("KERNEL_OK")
</pallas_src>

<mosaic_0001>
module attributes {stable_mosaic.version = 11 : i64} {
  func.func @_arctan_hf_kernel(%arg0: i32, %arg1: memref<8x128xf32, #tpu.memory_space<vmem>>, %arg2: memref<8x128xf32, #tpu.memory_space<vmem>>) attributes {dimension_semantics = [#tpu.dimension_semantics<parallel>], iteration_bounds = array<i64: 2>, scalar_prefetch = 0 : i64, scratch_operands = 0 : i64, tpu.core_type = #tpu.core_type<tc>, window_params = [{transform_indices = @transform_0, window_bounds = array<i64: 8, 128>}, {transform_indices = @transform_1, window_bounds = array<i64: 8, 128>}]} {
    %c0 = arith.constant 0 : index
    %c0_0 = arith.constant 0 : index
    %0 = vector.load %arg1[%c0, %c0_0] : memref<8x128xf32, #tpu.memory_space<vmem>>, vector<8x128xf32>
    %cst = arith.constant 1.000000e-16 : f32
    %cst_1 = arith.constant 1.000000e+00 : f32
    %1 = vector.broadcast %cst : f32 to vector<8x128xf32>
    %2 = arith.maximumf %1, %0 : vector<8x128xf32>
    %3 = vector.broadcast %cst_1 : f32 to vector<8x128xf32>
    %4 = arith.minimumf %3, %2 : vector<8x128xf32>
    %cst_2 = arith.constant 5.000000e-01 : f32
    %5 = vector.broadcast %cst_2 : f32 to vector<8x128xf32>
    %6 = arith.subf %4, %5 : vector<8x128xf32>
    %cst_3 = arith.constant 3.14159274 : f32
    %7 = vector.broadcast %cst_3 : f32 to vector<8x128xf32>
    %8 = arith.mulf %7, %6 : vector<8x128xf32>
    %9 = math.sin %8 : vector<8x128xf32>
    %10 = math.cos %8 : vector<8x128xf32>
    %11 = tpu.reciprocal %10 : vector<8x128xf32> -> vector<8x128xf32>
    %12 = arith.mulf %9, %11 : vector<8x128xf32>
    %c0_4 = arith.constant 0 : index
    %c0_5 = arith.constant 0 : index
    %13 = vector.load %arg2[%c0_4, %c0_5] : memref<8x128xf32, #tpu.memory_space<vmem>>, vector<8x128xf32>
    tpu.vector_store %arg2[%c0_4, %c0_5], %12 {strides = array<i32>} : memref<8x128xf32, #tpu.memory_space<vmem>>, vector<8x128xf32>,
    return
  }
  func.func @transform_0(%arg0: i32) -> (i32, i32) {
    %c0_i32 = arith.constant 0 : i32
    %c0_i32_0 = arith.constant 0 : i32
    return %arg0, %c0_i32 : i32, i32
  }
  func.func @transform_1(%arg0: i32) -> (i32, i32) {
    %c0_i32 = arith.constant 0 : i32
    %c0_i32_0 = arith.constant 0 : i32
    return %arg0, %c0_i32 : i32, i32
  }
}

</mosaic_0001>

<llo_original>
// kernel: _arctan_hf_impl.1
$region0: #{_arctan_hf_impl.1}
  #allocation0 [shape = 'u32[]', space=smem, size = 0x4, offset = 0x4, fixed_abs, tag = 'smem constant byte address 0x4 - core index']
  #allocation1 [shape = 'u32[144,128]{1,0:T(1,128)}', space=vmem, size = 0x12000, scoped, tag = 'internal scratch']
  %s0 = inlined_call_operand.vmem [shape: f32[16,128], index: 0, kind: input, shape index: {}]
  %s1 = inlined_call_operand.vmem [shape: f32[16,128], index: 1, kind: output, shape index: {}]
  %s2 = sld [smem:[#allocation0]]
  $region37: #{_arctan_hf_impl.1} parent=0
    _
  %s4 = ssub.s32 1, %s2
  %s5 = scalar_select 0, %s4, %s2
  loop: start=0, step=1, limit=4
  $region2: #{_arctan_hf_impl.1} parent=0 // loop_pre_header
    _
  $region3: #{_arctan_hf_impl.1} parent=0 // loop_header
    %s7 = sphi 0, %s11
    %p8 = scmp.ge.s32.totalorder %s7, 4
    %s17 = sphi 0, %s19
    %s20 = sphi 0, %s17
    %s21 = sphi 0, %s20
    %s37 = sphi 0, %s21
    %s43 = sphi 0, %s45
    %s46 = sphi 0, %s43
    %s47 = sphi 0, %s46
    %s63 = sphi 0, %s47
  $region4: #{_arctan_hf_impl.1} parent=0 // loop_header_branch
    %10 = sbr.rel (%p8) target = $region8
  $region5: #{_arctan_hf_impl.1} parent=0 // loop_body
    %s12 = ssub.s32 %s7, 1
    %s13 = ssub.s32 %s7, 2
    %s14 = sadd.s32 %s7, 1
    %s15 = ssub.s32 %s7, %s14
    %p16 = scmp.eq.s32.totalorder %s15, 0
    %s18 = sadd.s32 %s17, 1
    %s19 = scalar_select %p16, %s17, %s18
    %p22 = pneg %p16
    %p23 = scmp.eq.s32.totalorder %s7, 1
    %p24 = por %p22, %p23
    %p25 = scmp.ne.s32.totalorder %s17, %s20
    %p26 = scmp.eq.s32.totalorder %s7, 0
    %p27 = por %p25, %p26
    %p28 = scmp.ne.s32.totalorder %s17, %s20
    %p29 = scmp.eq.s32.totalorder %s12, 1
    %p30 = por %p28, %p29
    %p31 = scmp.ne.s32.totalorder %s20, %s21
    %p32 = scmp.eq.s32.totalorder %s12, 0
    %p33 = por %p31, %p32
    %p34 = scmp.ne.s32.totalorder %s20, %s21
    %p35 = scmp.eq.s32.totalorder %s13, 1
    %p36 = por %p34, %p35
    %p38 = scmp.ne.s32.totalorder %s21, %s37
    %p39 = scmp.eq.s32.totalorder %s13, 0
    %p40 = por %p38, %p39
    %s41 = ssub.s32 %s7, %s14
    %p42 = scmp.eq.s32.totalorder %s41, 0
    %s44 = sadd.s32 %s43, 1
    %s45 = scalar_select %p42, %s43, %s44
    %p48 = pneg %p42
    %p49 = scmp.eq.s32.totalorder %s7, 1
    %p50 = por %p48, %p49
    %p51 = scmp.ne.s32.totalorder %s43, %s46
    %p52 = scmp.eq.s32.totalorder %s7, 0
    %p53 = por %p51, %p52
    %p54 = scmp.ne.s32.totalorder %s43, %s46
    %p55 = scmp.eq.s32.totalorder %s12, 1
    %p56 = por %p54, %p55
    %p57 = scmp.ne.s32.totalorder %s46, %s47
    %p58 = scmp.eq.s32.totalorder %s12, 0
    %p59 = por %p57, %p58
    %p60 = scmp.ne.s32.totalorder %s46, %s47
    %p61 = scmp.eq.s32.totalorder %s13, 1
    %p62 = por %p60, %p61
    %p64 = scmp.ne.s32.totalorder %s47, %s63
    %p65 = scmp.eq.s32.totalorder %s13, 0
    %p66 = por %p64, %p65
    %p67 = scmp.le.s32.totalorder 1, %s7
    %p68 = scmp.lt.s32.totalorder %s7, 3
    %p69 = pnand %p67, %p68
    %p70 = pneg %p69
    // Predicated region
    $region9: #{_arctan_hf_impl.1} parent=5 // pred_check
      _
    $region10: #{_arctan_hf_impl.1} parent=5 // pred_check_branch
      %72 = sbr.rel (%p69) target = $region12
    $region11: #{_arctan_hf_impl.1} parent=5 // pred_region
      %s73 = ssub.s32 %s7, 1
    $region12: #{_arctan_hf_impl.1} parent=5 // pred_fallthru
      _
    %p74 = scmp.lt.s32.totalorder %s7, 2
    // Predicated region
    $region13: #{_arctan_hf_impl.1} parent=5 // pred_check
      %p75 = pneg %p74
    $region14: #{_arctan_hf_impl.1} parent=5 // pred_check_branch
      %77 = sbr.rel (%p75) target = $region16
    $region15: #{_arctan_hf_impl.1} parent=5 // pred_region
      // Predicated region
      $region17: #{_arctan_hf_impl.1} parent=15 // pred_check
        %p78 = pneg %p27
      $region18: #{_arctan_hf_impl.1} parent=15 // pred_check_branch
        %80 = sbr.rel (%p78) target = $region20
      $region19: #{_arctan_hf_impl.1} parent=15 // pred_region
        %p81 = scmp.lt.s32.totalorder %s7, 1
        %s82 = scalar_select %p81, %s7, 1
        %s83 = smul.addr %s82, 8
        %s84 = scalar_lea.vmem %s0, %s83
      $region20: #{_arctan_hf_impl.1} parent=15 // pred_fallthru
        _
    $region16: #{_arctan_hf_impl.1} parent=5 // pred_fallthru
      _
    %p85 = scmp.le.s32.totalorder 1, %s7
    %p86 = scmp.lt.s32.totalorder %s7, 3
    %p87 = pnand %p85, %p86
    %p88 = pneg %p87
    // Predicated region
    $region21: #{_arctan_hf_impl.1} parent=5 // pred_check
      _
    $region22: #{_arctan_hf_impl.1} parent=5 // pred_check_branch
      %90 = sbr.rel (%p87) target = $region24
    $region23: #{_arctan_hf_impl.1} parent=5 // pred_region
      %s91 = ssub.s32 %s7, 1
      %p92 = scmp.lt.s32.totalorder %s12, 1
      %s93 = scalar_select %p92, %s12, 1
      %s94 = smul.addr %s93, 8
      %s95 = scalar_lea.vmem %s0, %s94
      %p96 = pneg %p33
      %p97 = pneg %p30
      %p98 = pneg %p59
      %p99 = pneg %p56
      %p100 = scmp.lt.s32.totalorder %s12, 1
      %s101 = scalar_select %p100, %s12, 1
      %s102 = smul.addr %s101, 8
      %s103 = scalar_lea.vmem %s1, %s102
      %p104 = scmp.lt.s32.totalorder %s12, 1
      %s105 = scalar_select %p104, %s12, 1
      %s106 = smul.addr %s105, 8
      %s107 = scalar_lea.vmem %s0, %s106
      %p108 = scmp.lt.s32.totalorder %s12, 1
      %s109 = scalar_select %p108, %s12, 1
      %s110 = smul.addr %s109, 8
      %s111 = scalar_lea.vmem %s1, %s110
      %v112 = vld [vmem:[%s107] sm:$0xff]
      %v113 = vmax.f32 %v112, 1e-16
      %v114 = vmin.f32 %v113, 1.0
      %v115 = vsub.f32 %v114, 0.5
      %v116 = vmul.f32 %v115, 3.1415927
      %v117 = vand.u32 2147483647, %v116
      %vm118 = vcmp.le.f32.partialorder %v117, 0.7853982
      %vm119 = vcmp.lt.s32.totalorder %v116, 0
      %v120 = vand.u32 %v116, 2139095040
      %v121 = vshrl.u32 %v120, 23
      %v122 = vsub.s32 %v121, 127
      %v123 = vand.u32 2147483647, %v116
      %v124 = vand.u32 %v123, 8388607
      %v125 = vor.u32 %v124, 8388608
      %v126 = vsub.s32 0, %v125
      %v127 = vadd.s32 %v122, 1
      %vm128 = vcmp.gt.s32.totalorder %v127, 0
      %v129 = vsel %vm128, %v127, 0
      %v130 = vshrl.u32 %v129, 5
      %v131 = vand.u32 %v129, 31
      %v132 = vsub.s32 32, %v131
      %v133 = vshrl.u32 683565275, %v132
      %v134 = vshll.u32 683565275, %v131
      %v135 = vshrl.u32 2475754826, %v132
      %v136 = vor.u32 %v134, %v135
      %v137 = vshll.u32 2475754826, %v131
      %v138 = vshrl.u32 2131351028, %v132
      %v139 = vor.u32 %v137, %v138
      %v140 = vshll.u32 2131351028, %v131
      %v141 = vshrl.u32 2102212464, %v132
      %v142 = vor.u32 %v140, %v141
      %v143 = vshll.u32 2102212464, %v131
      %v144 = vshrl.u32 920167782, %v132
      %v145 = vor.u32 %v143, %v144
      %v146 = vshll.u32 920167782, %v131
      %v147 = vshrl.u32 1326507024, %v132
      %v148 = vor.u32 %v146, %v147
      %vm149 = vcmp.lt.s32.totalorder %v130, 1
      %vm150 = vcmp.lt.s32.totalorder %v130, 2
      %vm151 = vcmp.lt.s32.totalorder %v130, 3
      %vm152 = vcmp.lt.s32.totalorder %v130, 4
      %v153 = vsel %vm149, %v133, %v136
      %v154 = vsel %vm152, %v142, 2102212464
      %v155 = vsel %vm151, %v139, %v154
      %v156 = vsel %vm150, %v153, %v155
      %v157 = vsel %vm149, %v136, %v139
      %v158 = vsel %vm152, %v145, 920167782
      %v159 = vsel %vm151, %v142, %v158
      %v160 = vsel %vm150, %v157, %v159
      %v161 = vsel %vm149, %v139, %v142
      %v162 = vsel %vm152, %v148, 1326507024
      %v163 = vsel %vm151, %v145, %v162
      %v164 = vsel %vm150, %v161, %v163
      %v165 = vshll.u32 %v125, 8
      %v166 = vmul.u32.u64.compose %v165, %v164
      %v167 = vextract.low.u32 %v166
      %v168 = vextract.high.u32 %v166
      %v169 = vmul.u32.u64.compose %v165, %v160
      %v170 = vextract.low.u32 %v169
      %v171 = vextract.high.u32 %v169
      %v172 = vmul.u32 %v165, %v156
      %v173 = vadd.s32 %v168, %v170
      %vm174 = vc.u32 %v168, %v170
      %v175 = vadd.s32 %v171, 1
      %v176 = vsel %vm174, %v175, %v171
      %v177 = vadd.s32 %v172, %v176
      %v178 = vadd.s32 %v177, 536870912
      %v179 = vshrl.u32 %v178, 30
      %v180 = vshll.u32 %v179, 30
      %v181 = vsub.s32 %v177, %v180
      %vm182 = vcmp.lt.s32.totalorder %v181, 0
      %v183 = vsub.s32 0, %v181
      %v184 = vsel %vm182, %v183, %v181
      %v185 = vclz %v184
      %v186 = vsub.s32 %v185, 2
      %vm187 = vcmp.gt.s32.totalorder 0, %v186
      %v188 = vsel %vm187, 0, %v186
      %v189 = vsub.s32 32, %v188
      %v190 = vshll.u32 %v181, %v188
      %v191 = vshrl.u32 %v173, %v189
      %v192 = vor.u32 %v190, %v191
      %v193 = vsub.s32 4294967266, %v188
      %v194 = vadd.s32 %v193, 127
      %v195 = vshll.u32 %v194, 23
      %v196 = vor.u32 4788187, %v195
      %v197 = vand.u32 2147483647, %v196
      %v199 = vcvt.s32.f32 %v192
      %v200 = vmul.f32 %v199, %v197
      %v201 = vxor.u32 %v200, 2147483648
      %v202 = vsel %vm119, %v201, %v200
      %v203 = vsub.s32 4, %v179
      %v204 = vsel %vm119, %v203, %v179
      %v205 = vsel %vm118, %v116, %v202
      %v206 = vsel %vm118, 0, %v204
      %v207 = vcosq.f32.pop %v205
      %v208 = vsinq.f32.pop %v205
      %vm209 = vweird.f32 %v116
      %v210 = vadd.s32 %v206, 3
      %v211 = vand.u32 %v210, 3
      %vm212 = vcmp.lt.s32.totalorder %v211, 2
      %vm213 = vcmp.eq.s32.totalorder %v211, 0
      %v214 = vxor.u32 %v208, 2147483648
      %v215 = vsel %vm213, %v207, %v214
      %vm216 = vcmp.eq.s32.totalorder %v211, 2
      %v217 = vxor.u32 %v207, 2147483648
      %v218 = vsel %vm216, %v217, %v208
      %v219 = vsel %vm212, %v215, %v218
      %v220 = vsel %vm209, nan, %v219
      %v221 = vand.u32 2147483647, %v116
      %vm222 = vcmp.le.f32.partialorder %v221, 0.7853982
      %vm223 = vcmp.lt.s32.totalorder %v116, 0
      %v224 = vand.u32 %v116, 2139095040
      %v225 = vshrl.u32 %v224, 23
      %v226 = vsub.s32 %v225, 127
      %v227 = vand.u32 2147483647, %v116
      %v228 = vand.u32 %v227, 8388607
      %v229 = vor.u32 %v228, 8388608
      %v230 = vsub.s32 0, %v229
      %v231 = vadd.s32 %v226, 1
      %vm232 = vcmp.gt.s32.totalorder %v231, 0
      %v233 = vsel %vm232, %v231, 0
      %v234 = vshrl.u32 %v233, 5
      %v235 = vand.u32 %v233, 31
      %v236 = vsub.s32 32, %v235
      %v237 = vshrl.u32 683565275, %v236
      %v238 = vshll.u32 683565275, %v235
      %v239 = vshrl.u32 2475754826, %v236
      %v240 = vor.u32 %v238, %v239
      %v241 = vshll.u32 2475754826, %v235
      %v242 = vshrl.u32 2131351028, %v236
      %v243 = vor.u32 %v241, %v242
      %v244 = vshll.u32 2131351028, %v235
      %v245 = vshrl.u32 2102212464, %v236
      %v246 = vor.u32 %v244, %v245
      %v247 = vshll.u32 2102212464, %v235
      %v248 = vshrl.u32 920167782, %v236
      %v249 = vor.u32 %v247, %v248
      %v250 = vshll.u32 920167782, %v235
      %v251 = vshrl.u32 1326507024, %v236
      %v252 = vor.u32 %v250, %v251
      %vm253 = vcmp.lt.s32.totalorder %v234, 1
      %vm254 = vcmp.lt.s32.totalorder %v234, 2
      %vm255 = vcmp.lt.s32.totalorder %v234, 3
      %vm256 = vcmp.lt.s32.totalorder %v234, 4
      %v257 = vsel %vm253, %v237, %v240
      %v258 = vsel %vm256, %v246, 2102212464
      %v259 = vsel %vm255, %v243, %v258
      %v260 = vsel %vm254, %v257, %v259
      %v261 = vsel %vm253, %v240, %v243
      %v262 = vsel %vm256, %v249, 920167782
      %v263 = vsel %vm255, %v246, %v262
      %v264 = vsel %vm254, %v261, %v263
      %v265 = vsel %vm253, %v243, %v246
      %v266 = vsel %vm256, %v252, 1326507024
      %v267 = vsel %vm255, %v249, %v266
      %v268 = vsel %vm254, %v265, %v267
      %v269 = vshll.u32 %v229, 8
      %v270 = vmul.u32.u64.compose %v269, %v268
      %v271 = vextract.low.u32 %v270
      %v272 = vextract.high.u32 %v270
      %v273 = vmul.u32.u64.compose %v269, %v264
      %v274 = vextract.low.u32 %v273
      %v275 = vextract.high.u32 %v273
      %v276 = vmul.u32 %v269, %v260
      %v277 = vadd.s32 %v272, %v274
      %vm278 = vc.u32 %v272, %v274
      %v279 = vadd.s32 %v275, 1
      %v280 = vsel %vm278, %v279, %v275
      %v281 = vadd.s32 %v276, %v280
      %v282 = vadd.s32 %v281, 536870912
      %v283 = vshrl.u32 %v282, 30
      %v284 = vshll.u32 %v283, 30
      %v285 = vsub.s32 %v281, %v284
      %vm286 = vcmp.lt.s32.totalorder %v285, 0
      %v287 = vsub.s32 0, %v285
      %v288 = vsel %vm286, %v287, %v285
      %v289 = vclz %v288
      %v290 = vsub.s32 %v289, 2
      %vm291 = vcmp.gt.s32.totalorder 0, %v290
      %v292 = vsel %vm291, 0, %v290
      %v293 = vsub.s32 32, %v292
      %v294 = vshll.u32 %v285, %v292
      %v295 = vshrl.u32 %v277, %v293
      %v296 = vor.u32 %v294, %v295
      %v297 = vsub.s32 4294967266, %v292
      %v298 = vadd.s32 %v297, 127
      %v299 = vshll.u32 %v298, 23
      %v300 = vor.u32 4788187, %v299
      %v301 = vand.u32 2147483647, %v300
      %v303 = vcvt.s32.f32 %v296
      %v304 = vmul.f32 %v303, %v301
      %v305 = vxor.u32 %v304, 2147483648
      %v306 = vsel %vm223, %v305, %v304
      %v307 = vsub.s32 4, %v283
      %v308 = vsel %vm223, %v307, %v283
      %v309 = vsel %vm222, %v116, %v306
      %v310 = vsel %vm222, 0, %v308
      %v311 = vcosq.f32.pop %v309
      %v312 = vsinq.f32.pop %v309
      %vm313 = vweird.f32 %v116
      %v314 = vand.u32 %v310, 3
      %vm315 = vcmp.lt.s32.totalorder %v314, 2
      %vm316 = vcmp.eq.s32.totalorder %v314, 0
      %v317 = vxor.u32 %v312, 2147483648
      %v318 = vsel %vm316, %v311, %v317
      %vm319 = vcmp.eq.s32.totalorder %v314, 2
      %v320 = vxor.u32 %v311, 2147483648
      %v321 = vsel %vm319, %v320, %v312
      %v322 = vsel %vm315, %v318, %v321
      %v323 = vsel %vm313, nan, %v322
      %v324 = vrcp.pop %v323
      %v325 = vmul.f32 %v220, %v324
      %326 = vst [vmem:[%s111] sm:$0xff] %v325
      %p327 = scmp.lt.s32.totalorder %s12, 1
      %s328 = scalar_select %p327, %s12, 1
      %s329 = smul.addr %s328, 8
      %s330 = scalar_lea.vmem %s1, %s329
      // Predicated region
      $region25: #{_arctan_hf_impl.1} parent=23 // pred_check
        %p331 = pneg %p56
      $region26: #{_arctan_hf_impl.1} parent=23 // pred_check_branch
        %333 = sbr.rel (%p331) target = $region28
      $region27: #{_arctan_hf_impl.1} parent=23 // pred_region
        _
      $region28: #{_arctan_hf_impl.1} parent=23 // pred_fallthru
        _
    $region24: #{_arctan_hf_impl.1} parent=5 // pred_fallthru
      _
    %p334 = scmp.le.s32.totalorder 2, %s7
    // Predicated region
    $region29: #{_arctan_hf_impl.1} parent=5 // pred_check
      %p335 = pneg %p334
    $region30: #{_arctan_hf_impl.1} parent=5 // pred_check_branch
      %337 = sbr.rel (%p335) target = $region32
    $region31: #{_arctan_hf_impl.1} parent=5 // pred_region
      %s338 = ssub.s32 %s7, 2
      // Predicated region
      $region33: #{_arctan_hf_impl.1} parent=31 // pred_check
        %p339 = pneg %p62
      $region34: #{_arctan_hf_impl.1} parent=31 // pred_check_branch
        %341 = sbr.rel (%p339) target = $region36
      $region35: #{_arctan_hf_impl.1} parent=31 // pred_region
        %p342 = scmp.lt.s32.totalorder %s13, 1
        %s343 = scalar_select %p342, %s13, 1
        %s344 = smul.addr %s343, 8
        %s345 = scalar_lea.vmem %s1, %s344
      $region36: #{_arctan_hf_impl.1} parent=31 // pred_fallthru
        _
    $region32: #{_arctan_hf_impl.1} parent=5 // pred_fallthru
      _
  $region6: #{_arctan_hf_impl.1} parent=0 // loop_footer
    %s11 = sadd.s32 1, %s7
  $region7: #{_arctan_hf_impl.1} parent=0 // loop_footer_branch
    %6 = sbr.rel target = $region3
  $region8: #{_arctan_hf_impl.1} parent=0 // loop_exit
    _

</llo_original>
